<compile_context>
chip_gen: v7x
topology: tpu7x:2x2x1
jax: 0.10.0
libtpu: 0.0.40
codegen_flags: <defaults>
</compile_context>

<pallas_src>
import functools

import jax
import jax.numpy as jnp
from jax.experimental import pallas as pl
from jax.experimental.pallas import tpu as pltpu


# ============================================================================
# VMEM budgeting (generation-aware: v7x has 64 MiB/TC, v5e/v6e 128 MiB)
# ============================================================================
@functools.lru_cache(maxsize=None)
def _vmem_caps():
    try:
        cap = int(pltpu.get_tpu_info().vmem_capacity_bytes)
    except Exception:                                  # conservative default
        cap = 128 * 1024 * 1024
    budget = max(8 << 20, min(cap // 3, 48 << 20))     # per-kernel working-set target
    limit = max(32 << 20, min(cap * 3 // 4, 96 << 20)) # scoped-VMEM limit for Mosaic
    return budget, limit


def _pick_row_block(H, Wp, Cin, Cout, K, n_epi):
    """Output rows per grid step so the double-buffered working set fits VMEM."""
    budget, _ = _vmem_caps()
    per_row = Wp * (4 * Cin                 # input tile (2 buffers, bf16)
                    + 2 * K * K * Cin       # in-kernel im2col patches (bf16)
                    + 4 * Cout              # f32 accumulator
                    + 4 * Cout              # output tile (2 buffers, bf16)
                    + 4 * Cout * n_epi)     # fused mul/add operands
    rb = max(1, int(budget // max(per_row, 1)))
    if rb >= H:
        return H
    rb = max(8, (rb // 8) * 8)              # keep rb*Wp a multiple of 8 when tiled
    return min(rb, H)


# ============================================================================
# Pallas kernels
# ============================================================================
def _conv_kernel(x_ref, w_ref, b_ref, *rest, Mb, Wp, K, activation,
                 has_scale, has_mul, has_add):
    """Fused 'same' KxK conv (stride 1) on a row-flattened padded row-block.

    x_ref : (1, 1, Lb, Cin) bf16, Lb = (RB+K-1)*Wp + K-1 (block incl. halo)
    w_ref : (K*K*Cin, Cout) bf16 (tap-major, channel-minor rows)
    b_ref : (1, Cout) f32
    rest  : [scale (1,Cout) f32] [mul (1,Mb,Cout) bf16] [add (1,Mb,Cout) bf16], o_ref
    o_ref : (1, Mb, Cout) bf16 with Mb = RB*Wp (K-1 garbage cols/row, cropped later)
    """
    idx = 0
    scale_ref = mul_ref = add_ref = None
    if has_scale:
        scale_ref = rest[idx]; idx += 1
    if has_mul:
        mul_ref = rest[idx]; idx += 1
    if has_add:
        add_ref = rest[idx]; idx += 1
    o_ref = rest[idx]

    # im2col from K*K contiguous shifted slices -> ONE MXU dot (contraction K*K*Cin)
    if K == 1:
        patches = x_ref[0, 0, 0:Mb, :]
    else:
        pieces = []
        for kh in range(K):
            for kw in range(K):
                off = kh * Wp + kw
                pieces.append(x_ref[0, 0, off:off + Mb, :])
        patches = jnp.concatenate(pieces, axis=-1)
    acc = jnp.dot(patches, w_ref[...], preferred_element_type=jnp.float32)
    acc = acc + b_ref[...]
    if activation == "relu":
        acc = jnp.maximum(acc, 0.0)
    elif activation == "sigmoid":
        acc = jax.nn.sigmoid(acc)            # transcendental on the EUP slot
    if has_scale:                            # GridNet per-channel coefficient
        acc = acc * scale_ref[...]
    if has_mul:                              # fused group-attention multiply
        acc = acc * mul_ref[0].astype(jnp.float32)
    if has_add:                              # fused residual / junction add
        acc = acc + add_ref[0].astype(jnp.float32)
    # TODO(synk): Cout=3/16 heads leave most lanes idle; a lane-dense (spatial
    # into lanes) repack of the store would further cut epilogue/store cost.
    o_ref[0] = acc.astype(o_ref.dtype)       # single bf16 store of the tile


@functools.lru_cache(maxsize=None)
def _build_conv(N, nB, Lb, Mb, Cin, Cout, K, Wp, activation,
                has_scale, has_mul, has_add):
    _, vmem_limit = _vmem_caps()
    kernel = functools.partial(_conv_kernel, Mb=Mb, Wp=Wp, K=K,
                               activation=activation, has_scale=has_scale,
                               has_mul=has_mul, has_add=has_add)
    in_specs = [
        pl.BlockSpec((1, 1, Lb, Cin), lambda n, rb: (n, rb, 0, 0)),
        pl.BlockSpec((K * K * Cin, Cout), lambda n, rb: (0, 0)),
        pl.BlockSpec((1, Cout), lambda n, rb: (0, 0)),
    ]
    if has_scale:
        in_specs.append(pl.BlockSpec((1, Cout), lambda n, rb: (0, 0)))
    if has_mul:
        in_specs.append(pl.BlockSpec((1, Mb, Cout), lambda n, rb: (n, rb, 0)))
    if has_add:
        in_specs.append(pl.BlockSpec((1, Mb, Cout), lambda n, rb: (n, rb, 0)))
    flops = 2 * N * nB * Mb * (K * K * Cin) * Cout
    transc = N * nB * Mb * Cout if activation == "sigmoid" else 0
    bytes_acc = (N * nB * Lb * Cin * 2 + K * K * Cin * Cout * 2
                 + N * nB * Mb * Cout * 2 * (1 + int(has_mul) + int(has_add)))
    fn = pl.pallas_call(
        kernel,
        out_shape=jax.ShapeDtypeStruct((N, nB * Mb, Cout), jnp.bfloat16),
        grid=(N, nB),
        in_specs=in_specs,
        out_specs=pl.BlockSpec((1, Mb, Cout), lambda n, rb: (n, rb, 0)),
        compiler_params=pltpu.CompilerParams(
            dimension_semantics=("parallel", "parallel"),
            vmem_limit_bytes=vmem_limit),
        cost_estimate=pl.CostEstimate(flops=flops, transcendentals=transc,
                                      bytes_accessed=bytes_acc),
    )
    return jax.jit(fn)


def _rdb_kernel(*refs, H, Wp, C, G, ND, has_scale):
    """A whole Residual Dense Block in one kernel (slab-packed contractions).

    x_ref : (1, L, C) bf16 flattened zero-padded input, L = (H+2)*(W+2) + 2
    wd_ref: (ND, 9*Cmax, G) bf16 packed dense 3x3 weights (group-major rows,
            zero-padded so layer l uses exactly the first 9*(C+l*G) rows)
    bd_ref: (ND, 1, G) f32 ; w1_ref: (C+ND*G, C) bf16 ; b1_ref: (1, C) f32
    scale : (1, C) f32 optional GridNet coefficient
    o_ref : (1, M, C) bf16, M = H*Wp
    buf   : VMEM scratch (ND-1, L, G) bf16 - growth slabs kept on chip
    """
    if has_scale:
        x_ref, wd_ref, bd_ref, w1_ref, b1_ref, scale_ref, o_ref, buf = refs
    else:
        x_ref, wd_ref, bd_ref, w1_ref, b1_ref, o_ref, buf = refs
        scale_ref = None

    W = Wp - 2
    M = H * Wp
    L = x_ref.shape[1]
    pad_off = Wp + 1                     # flat offset of interior pixel (0,0)
    offs = [kh * Wp + kw for kh in range(3) for kw in range(3)]

    # Re-zero ONLY the padded border rows of the slab scratch (the interior is
    # fully rewritten each grid step, so no full-scratch zeroing).
    zb = jnp.zeros((buf.shape[0], pad_off, G), buf.dtype)
    buf[:, 0:pad_off, :] = zb
    buf[:, pad_off + M:L, :] = zb        # L - pad_off - M == pad_off

    col = jax.lax.broadcasted_iota(jnp.int32, (M, 1), 0) % Wp
    interior = col < W                   # over-computed cols are the next row's zero pad

    # TODO(synk): for production resolutions add a row-block grid axis with a
    # 4-row halo (one row per fused conv layer) like the plain conv kernel.
    patches = jnp.concatenate([x_ref[0, off:off + M, :] for off in offs], axis=-1)
    centers = []
    for l in range(ND):                  # each dense layer = ONE dot, contraction 9*(C+l*G)
        acc = jnp.dot(patches, wd_ref[l, 0:9 * (C + l * G), :],
                      preferred_element_type=jnp.float32)
        acc = jnp.maximum(acc + bd_ref[l], 0.0)
        acc = jnp.where(interior, acc, 0.0)
        centers.append(acc.astype(jnp.bfloat16))
        if l < ND - 1:                   # last slab only needed at its centre taps
            buf[l, pad_off:pad_off + M, :] = acc.astype(buf.dtype)
            patches = jnp.concatenate(
                [patches] + [buf[l, off:off + M, :] for off in offs], axis=-1)

    # 1x1 fusion over concat([x, slab0..slab_{ND-1}]) + residual (+ coefficient)
    xc = x_ref[0, pad_off:pad_off + M, :]
    feat = jnp.concatenate([xc] + centers, axis=-1)          # (M, C + ND*G) bf16
    out = jnp.dot(feat, w1_ref[...], preferred_element_type=jnp.float32) + b1_ref[...]
    out = out + xc.astype(jnp.float32)
    if has_scale:
        out = out * scale_ref[...]
    o_ref[0] = out.astype(o_ref.dtype)


@functools.lru_cache(maxsize=None)
def _build_rdb(N, L, C, G, ND, Wp, H, has_scale):
    _, vmem_limit = _vmem_caps()
    M = H * Wp
    Cmax = C + (ND - 1) * G
    Ctot = C + ND * G
    kernel = functools.partial(_rdb_kernel, H=H, Wp=Wp, C=C, G=G, ND=ND,
                               has_scale=has_scale)
    in_specs = [
        pl.BlockSpec((1, L, C), lambda n: (n, 0, 0)),
        pl.BlockSpec((ND, 9 * Cmax, G), lambda n: (0, 0, 0)),
        pl.BlockSpec((ND, 1, G), lambda n: (0, 0, 0)),
        pl.BlockSpec((Ctot, C), lambda n: (0, 0)),
        pl.BlockSpec((1, C), lambda n: (0, 0)),
    ]
    if has_scale:
        in_specs.append(pl.BlockSpec((1, C), lambda n: (0, 0)))
    flops = 2 * N * M * (sum(9 * (C + l * G) * G for l in range(ND)) + Ctot * C)
    bytes_acc = (N * (L * C + M * C) * 2
                 + (ND * 9 * Cmax * G + Ctot * C) * 2)
    fn = pl.pallas_call(
        kernel,
        out_shape=jax.ShapeDtypeStruct((N, M, C), jnp.bfloat16),
        grid=(N,),
        in_specs=in_specs,
        out_specs=pl.BlockSpec((1, M, C), lambda n: (n, 0, 0)),
        scratch_shapes=[pltpu.VMEM((max(1, ND - 1), L, G), jnp.bfloat16)],
        compiler_params=pltpu.CompilerParams(
            dimension_semantics=("parallel",),
            vmem_limit_bytes=vmem_limit),
        cost_estimate=pl.CostEstimate(flops=flops, transcendentals=0,
                                      bytes_accessed=bytes_acc),
    )
    return jax.jit(fn)


# ============================================================================
# Conv wrappers (padding / layout / stride / transposed conv = XLA glue)
# ============================================================================
def _epilogue_flat(t, Wp, rows_total):
    """NHWC epilogue operand (mul / add) -> padded-width flat bf16 layout."""
    N, H, W, C = t.shape
    t = t.astype(jnp.bfloat16)
    t = jnp.pad(t, ((0, 0), (0, rows_total - H), (0, Wp - W), (0, 0)))
    return t.reshape(N, rows_total * Wp, C)


def conv2d(x, w, b, *, stride=1, activation=None, pre_padded=False,
           scale=None, mul=None, add=None):
    """x: (N,H,W,Cin) NHWC;  w: (K*K,Cin,Cout) bf16;  b: (1,Cout) f32.
    Fused epilogue: y = act(conv + b); y *= scale; y *= mul; y += add."""
    KK, Cin, Cout = w.shape
    K = int(round(KK ** 0.5))
    if not pre_padded:
        p = (K - 1) // 2
        if p:
            x = jnp.pad(x, ((0, 0), (p, p), (p, p), (0, 0)))
    N, Hp, Wp, _ = x.shape
    H, W = Hp - K + 1, Wp - K + 1
    RB = _pick_row_block(H, Wp, Cin, Cout, K,
                         n_epi=int(mul is not None) + int(add is not None))
    nB = -(-H // RB)
    Mb = RB * Wp
    Lb = (RB + K - 1) * Wp + (K - 1)               # row block + (K-1)-row halo

    xf = x.astype(jnp.bfloat16).reshape(N, Hp * Wp, Cin)
    need = (nB - 1) * RB * Wp + Lb
    if need > Hp * Wp:
        xf = jnp.pad(xf, ((0, 0), (0, need - Hp * Wp), (0, 0)))
    xb = jnp.stack([xf[:, rb * RB * Wp:rb * RB * Wp + Lb, :] for rb in range(nB)],
                   axis=1)                          # (N, nB, Lb, Cin) halo'd blocks

    args = [xb, w.reshape(K * K * Cin, Cout), b]
    if scale is not None:
        args.append(jnp.asarray(scale, jnp.float32).reshape(1, Cout))
    if mul is not None:
        args.append(_epilogue_flat(mul, Wp, nB * RB))
    if add is not None:
        args.append(_epilogue_flat(add, Wp, nB * RB))
    out = _build_conv(N, nB, Lb, Mb, Cin, Cout, K, Wp, activation,
                      scale is not None, mul is not None, add is not None)(*args)
    # TODO(synk): keeping the padded-flat layout between same-resolution layers
    # would remove this crop + the next layer's re-pad/flatten HBM passes.
    out = out.reshape(N, nB * RB, Wp, Cout)[:, :H, :W, :]
    if stride > 1:
        # TODO(synk): stride handled by full-res conv + subsample; a phase-split
        # stride-aware kernel would save ~4x on the two strided DownSample convs.
        out = out[:, ::stride, ::stride, :]
    return out


def conv_transpose2d(x, w, b, out_hw, *, stride=2, pad=1, activation=None):
    """ConvTranspose2d(k=3, stride=2, padding=1, output_size=out_hw) as zero
    stuffing + asymmetric pad + valid conv (weights are synthetic, stored in
    correlation form).
    TODO(synk): real PyTorch ConvTranspose2d weights need a spatial flip +
    in/out channel swap; a stride^2-phase sub-pixel conv would also avoid
    multiplying the stuffed zeros."""
    N, H, W, Cin = x.shape
    K = int(round(w.shape[0] ** 0.5))
    Hs, Ws = (H - 1) * stride + 1, (W - 1) * stride + 1
    xs = jnp.zeros((N, Hs, Ws, Cin), x.dtype).at[:, ::stride, ::stride, :].set(x)
    out_h, out_w = out_hw
    op_h = out_h - ((H - 1) * stride - 2 * pad + K)
    op_w = out_w - ((W - 1) * stride - 2 * pad + K)
    lo = K - 1 - pad
    xp = jnp.pad(xs, ((0, 0), (lo, lo + op_h), (lo, lo + op_w), (0, 0)))
    return conv2d(xp, w, b, pre_padded=True, activation=activation)


def nearest_resize(x, out_h, out_w):
    """PyTorch F.interpolate(mode='nearest'): src = floor(dst * in / out)."""
    N, H, W, C = x.shape
    hi = (jnp.arange(out_h) * H) // out_h
    wi = (jnp.arange(out_w) * W) // out_w
    return jnp.take(jnp.take(x, hi, axis=1), wi, axis=2)


def expand_attention(att, net_channels, group):
    """PyTorch split/cat group semantics == repeat_interleave of attention channels."""
    chunk = net_channels // group
    achunk = att.shape[-1] // group
    if chunk == achunk:
        return att
    return jnp.repeat(att, chunk // achunk, axis=-1)


# ============================================================================
# Parameters (deterministic synthetic init)
# ============================================================================
def key_iter(seed=0):
    key = jax.random.PRNGKey(seed)
    while True:
        key, sub = jax.random.split(key)
        yield sub


def conv_params(key, k, cin, cout, scale=0.05):
    w = scale * jax.random.normal(key, (k * k, cin, cout), jnp.float32)
    return w.astype(jnp.bfloat16), jnp.zeros((1, cout), jnp.float32)


# ---------------- RDB (standard GridDehazeNet residual dense block) ----------
def make_rdb_params(it, in_channels, num_dense_layer=4, growth_rate=16):
    C, G, ND = in_channels, growth_rate, num_dense_layer
    Cmax = C + (ND - 1) * G
    Ctot = C + ND * G
    # Dense 3x3 weights packed group-major (x, slab0, slab1, ...) with each
    # group tap-major/channel-minor, zero-padded to 9*Cmax rows per layer.
    wd = jnp.zeros((ND, 9 * Cmax, G), jnp.float32)
    for l in range(ND):
        cin = C + l * G
        wfull = 0.05 * jax.random.normal(next(it), (9, cin, G), jnp.float32)
        groups = [wfull[:, :C, :]] + [wfull[:, C + m * G:C + (m + 1) * G, :]
                                      for m in range(l)]
        rows = jnp.concatenate([g.reshape(9 * g.shape[1], G) for g in groups], axis=0)
        wd = wd.at[l, :rows.shape[0], :].set(rows)
    w1 = 0.05 * jax.random.normal(next(it), (Ctot, C), jnp.float32)
    return {"wd": wd.astype(jnp.bfloat16),
            "bd": jnp.zeros((ND, 1, G), jnp.float32),
            "w1": w1.astype(jnp.bfloat16),
            "b1": jnp.zeros((1, C), jnp.float32),
            "growth": G, "num_dense": ND}


def rdb_forward(p, x, scale=None):
    N, H, W, C = x.shape
    G, ND = p["growth"], p["num_dense"]
    Hp, Wp = H + 2, W + 2
    L = Hp * Wp + 2
    xp = jnp.pad(x, ((0, 0), (1, 1), (1, 1), (0, 0)))
    xf = xp.astype(jnp.bfloat16).reshape(N, Hp * Wp, C)
    xf = jnp.pad(xf, ((0, 0), (0, 2), (0, 0)))
    args = [xf, p["wd"], p["bd"], p["w1"], p["b1"]]
    if scale is not None:
        args.append(jnp.asarray(scale, jnp.float32).reshape(1, C))
    out = _build_rdb(N, L, C, G, ND, Wp, H, scale is not None)(*args)
    return out.reshape(N, H, Wp, C)[:, :, :W, :]


# ---------------- Down / Up sample --------------------------------------------
def downsample_forward(p, x, scale=None, add=None):
    out = conv2d(x, *p["conv1"], stride=2, activation="relu")
    return conv2d(out, *p["conv2"], activation="relu", scale=scale, add=add)


def upsample_forward(p, x, out_hw, scale=None, add=None):
    out = conv_transpose2d(x, *p["deconv"], out_hw, activation="relu")
    return conv2d(out, *p["conv"], activation="relu", scale=scale, add=add)


# ---------------- GridDehazeNetPrune2 ------------------------------------------
def make_gdn_params(it, *, multiscale, need_semantic, in_channels=3, depth_rate=16,
                    stride=2, height=3, width=6, num_dense_layer=4, growth_rate=16):
    p = {"height": height, "width": width, "stride": stride, "depth_rate": depth_rate}
    cin = 2 * in_channels if multiscale else in_channels
    p["conv_in"] = conv_params(next(it), 3, cin, depth_rate)
    p["conv_out"] = conv_params(next(it), 3, depth_rate, in_channels)
    p["rdb_in"] = make_rdb_params(it, depth_rate, num_dense_layer, growth_rate)
    p["rdb_out"] = make_rdb_params(it, depth_rate, num_dense_layer, growth_rate)
    p["coefficient"] = jnp.ones(
        (height, width, 2, depth_rate * stride ** (height - 1)), jnp.float32)
    if need_semantic:
        p["to120"] = conv_params(next(it), 3, depth_rate, 120)
        p["to_dr"] = conv_params(next(it), 3, 120, depth_rate)
    p["rdb"], p["down"], p["up"] = {}, {}, {}
    c = depth_rate
    for i in range(height):
        for j in range(width - 1):
            p["rdb"][(i, j)] = make_rdb_params(it, c, num_dense_layer, growth_rate)
        c *= stride
    c = depth_rate
    for i in range(height - 1):
        for j in range(width // 2):
            p["down"][(i, j)] = {
                "conv1": conv_params(next(it), 3, c, c),
                "conv2": conv_params(next(it), 3, c, stride * c),
            }
        c *= stride
    for i in range(height - 2, -1, -1):
        for j in range(width // 2, width):
            p["up"][(i, j)] = {
                "deconv": conv_params(next(it), 3, c, c),
                "conv": conv_params(next(it), 3, c, c // stride),
            }
        c //= stride
    return p


def gdn_forward(p, x, semantic_att=None):
    height, width = p["height"], p["width"]
    stride, depth_rate = p["stride"], p["depth_rate"]
    coef = p["coefficient"]

    def cvec(i, j, k, ch):
        return coef[i, j, k, :ch]

    inp = conv2d(x, *p["conv_in"])
    xi = [[None] * width for _ in range(height)]
    xi[0][0] = rdb_forward(p["rdb_in"], inp)
    if semantic_att is not None:
        att120 = expand_attention(semantic_att, 120, group=30)
        net_out = conv2d(xi[0][0], *p["to120"], mul=att120)       # fused attention mul
        xi[0][0] = conv2d(net_out, *p["to_dr"], add=xi[0][0])     # fused residual add
    for j in range(1, width // 2):
        xi[0][j] = rdb_forward(p["rdb"][(0, j - 1)], xi[0][j - 1])
    for i in range(1, height):
        xi[i][0] = downsample_forward(p["down"][(i - 1, 0)], xi[i - 1][0])
    for i in range(1, height):
        xi[i][1] = rdb_forward(p["rdb"][(i, 0)], xi[i][0])
    for i in range(1, height):
        ch = int(2 ** (i - 1) * stride * depth_rate)
        branch = rdb_forward(p["rdb"][(i, 1)], xi[i][1], scale=cvec(i, 2, 0, ch))
        xi[i][2] = downsample_forward(p["down"][(i - 1, 2)], xi[i - 1][2],
                                      scale=cvec(i, 2, 1, ch), add=branch)
    for j in range(width // 2, width):
        xi[height - 1][j] = rdb_forward(p["rdb"][(height - 1, j - 1)],
                                        xi[height - 1][j - 1])
    for i in range(height - 2, -1, -1):
        ch = int(2 ** (i - 1) * stride * depth_rate)
        branch = rdb_forward(p["rdb"][(i, 2)], xi[i][2], scale=cvec(i, 3, 0, ch))
        xi[i][3] = upsample_forward(p["up"][(i, 3)], xi[i + 1][3], xi[i][2].shape[1:3],
                                    scale=cvec(i, 3, 1, ch), add=branch)
    for i in range(0, height - 1):
        xi[i][4] = rdb_forward(p["rdb"][(i, 3)], xi[i][3])
    for i in range(height - 2, -1, -1):
        ch = int(2 ** (i - 1) * stride * depth_rate)
        branch = rdb_forward(p["rdb"][(i, 4)], xi[i][4], scale=cvec(i, 5, 0, ch))
        xi[i][5] = upsample_forward(p["up"][(i, 5)], xi[i + 1][5], xi[i][4].shape[1:3],
                                    scale=cvec(i, 5, 1, ch), add=branch)
    out = rdb_forward(p["rdb_out"], xi[0][5])
    return conv2d(out, *p["conv_out"], activation="relu")


# ---------------- MultiScaleGridModel (fine model) ------------------------------
def multiscale_forward(p, coarse_out, semantic_att, final_mul=None, *,
                       levels=3, scale=0.5):
    N, H, W, _ = coarse_out.shape
    inp_pred, x_ori = coarse_out, coarse_out
    outs = []
    for i in range(levels):
        s = scale ** (levels - i - 1)
        hi, wi = int(round(H * s)), int(round(W * s))
        inp_haze = nearest_resize(x_ori, hi, wi)
        inp_pred_r = nearest_resize(inp_pred, hi, wi)
        att = nearest_resize(semantic_att, hi, wi)
        inp_all = jnp.concatenate([inp_haze, inp_pred_r], axis=-1)   # 6 channels
        inp_pred = gdn_forward(p["GDN"], inp_all, semantic_att=att)
        # TODO(synk): ToPILImage().save(...) per-level image dump is a filesystem side effect; skipped.
        if i == levels - 1:     # need_depth == True: 3 -> 32, with FinalModel's
            # depth group-attention multiply fused into the conv epilogue.
            inp_pred = conv2d(inp_pred, *p["conv_out"], mul=final_mul)
        outs.append(inp_pred)
    return outs


# ---------------- Placeholder attention / group-conv blocks ---------------------
# TODO(synk): AttentionBlock / GroupConv and the external depth & semantic
# extraction models are not defined in the provided source; deterministic
# stand-ins with channel counts consistent with groupAttentionMul usage.
def attention_block_forward(p, x):
    x = conv2d(x, *p["c1"], activation="relu")
    return conv2d(x, *p["c2"], activation="sigmoid")


def make_group_conv_params(it, in_channels=32, group=8, out_channels=3):
    # grouped 3x3 conv expressed as ONE block-diagonal (Cin,Cin) weight
    cpg = in_channels // group
    w = jnp.zeros((9, in_channels, in_channels), jnp.float32)
    for g in range(group):
        blk = 0.05 * jax.random.normal(next(it), (9, cpg, cpg), jnp.float32)
        w = w.at[:, g * cpg:(g + 1) * cpg, g * cpg:(g + 1) * cpg].set(blk)
    return {"conv": (w.astype(jnp.bfloat16),
                     jnp.zeros((1, in_channels), jnp.float32)),
            "proj": conv_params(next(it), 1, in_channels, out_channels)}


def group_conv_forward(p, x, residual):
    out = conv2d(x, *p["conv"])                       # block-diagonal grouped conv
    return conv2d(out, *p["proj"], add=residual)      # 1x1 proj + fused final residual


# ---------------- FinalModel -----------------------------------------------------
def build_params():
    it = key_iter(0)
    params = {}
    params["coarse"] = make_gdn_params(it, multiscale=False, need_semantic=False)
    params["fine"] = {
        "GDN": make_gdn_params(it, multiscale=True, need_semantic=True),
        "conv_out": conv_params(next(it), 3, 3, 32),
    }
    params["depth_att"] = {"c1": conv_params(next(it), 3, 1, 4),
                           "c2": conv_params(next(it), 3, 4, 8)}
    params["sem_att"] = {"c1": conv_params(next(it), 3, 3, 15),
                         "c2": conv_params(next(it), 3, 15, 30)}
    params["group_conv"] = make_group_conv_params(it)
    return params


def final_model_forward(params, x_nchw):
    x = jnp.transpose(x_nchw, (0, 2, 3, 1)).astype(jnp.float32)   # NCHW -> NHWC
    coarse_out = gdn_forward(params["coarse"], x)                  # (N,H,W,3) bf16
    # TODO(synk): cv2.imwrite of coarse / residual maps is a filesystem side effect; skipped.
    # TODO(synk): depth_extract_model / semantic_extract_model are external nets
    # (None in the reference constructor); deterministic placeholder features
    # derived from coarse_out are used instead.
    depth_map = jnp.mean(coarse_out, axis=-1, keepdims=True)       # placeholder depth
    depth_att = attention_block_forward(params["depth_att"], depth_map)    # (N,H,W,8)
    semantic_att = attention_block_forward(params["sem_att"], coarse_out)  # (N,H,W,30)
    depth_mul = expand_attention(depth_att, 32, group=8)                   # (N,H,W,32)
    fine_out = multiscale_forward(params["fine"], coarse_out, semantic_att,
                                  final_mul=depth_mul)[-1]         # (N,H,W,32) depth-gated
    out = group_conv_forward(params["group_conv"], fine_out, coarse_out)   # + coarse residual
    return jnp.transpose(out, (0, 3, 1, 2)).astype(jnp.float32)    # back to NCHW


if __name__ == "__main__":
    params = build_params()
    x = jax.random.uniform(jax.random.PRNGKey(0), (2, 3, 8, 8), jnp.float32)  # NCHW
    out = final_model_forward(params, x)
    jax.block_until_ready(out)
    assert out.shape == (2, 3, 8, 8)
    print("KERNEL_OK")
</pallas_src>

<mosaic_0001>
module attributes {stable_mosaic.version = 11 : i64} {
  func.func @_conv_kernel(%arg0: i32, %arg1: i32, %arg2: memref<1x1x102x3xbf16, #tpu.memory_space<vmem>>, %arg3: memref<27x16xbf16, #tpu.memory_space<vmem>>, %arg4: memref<1x16xf32, #tpu.memory_space<vmem>>, %arg5: memref<1x80x16xbf16, #tpu.memory_space<vmem>>) attributes {dimension_semantics = [#tpu.dimension_semantics<parallel>, #tpu.dimension_semantics<parallel>], iteration_bounds = array<i64: 2, 1>, scalar_prefetch = 0 : i64, scratch_operands = 0 : i64, tpu.core_type = #tpu.core_type<tc>, window_params = [{transform_indices = @transform_0, window_bounds = array<i64: 1, 1, 102, 3>}, {pipeline_mode = #tpu.pipeline_mode<synchronous>, transform_indices = @transform_1, window_bounds = array<i64: 27, 16>}, {pipeline_mode = #tpu.pipeline_mode<synchronous>, transform_indices = @transform_2, window_bounds = array<i64: 1, 16>}, {transform_indices = @transform_3, window_bounds = array<i64: 1, 80, 16>}]} {
    %c0 = arith.constant 0 : index
    %c0_0 = arith.constant 0 : index
    %c0_1 = arith.constant 0 : index
    %c0_2 = arith.constant 0 : index
    %0 = vector.load %arg2[%c0, %c0_0, %c0_1, %c0_2] : memref<1x1x102x3xbf16, #tpu.memory_space<vmem>>, vector<1x1x80x3xbf16>
    %1 = vector.shape_cast %0 : vector<1x1x80x3xbf16> to vector<80x3xbf16>
    %c0_3 = arith.constant 0 : index
    %c0_4 = arith.constant 0 : index
    %c1 = arith.constant 1 : index
    %c0_5 = arith.constant 0 : index
    %2 = vector.load %arg2[%c0_3, %c0_4, %c1, %c0_5] : memref<1x1x102x3xbf16, #tpu.memory_space<vmem>>, vector<1x1x80x3xbf16>
    %3 = vector.shape_cast %2 : vector<1x1x80x3xbf16> to vector<80x3xbf16>
    %c0_6 = arith.constant 0 : index
    %c0_7 = arith.constant 0 : index
    %c2 = arith.constant 2 : index
    %c0_8 = arith.constant 0 : index
    %4 = vector.load %arg2[%c0_6, %c0_7, %c2, %c0_8] : memref<1x1x102x3xbf16, #tpu.memory_space<vmem>>, vector<1x1x80x3xbf16>
    %5 = vector.shape_cast %4 : vector<1x1x80x3xbf16> to vector<80x3xbf16>
    %c0_9 = arith.constant 0 : index
    %c0_10 = arith.constant 0 : index
    %c10 = arith.constant 10 : index
    %c0_11 = arith.constant 0 : index
    %6 = vector.load %arg2[%c0_9, %c0_10, %c10, %c0_11] : memref<1x1x102x3xbf16, #tpu.memory_space<vmem>>, vector<1x1x80x3xbf16>
    %7 = vector.shape_cast %6 : vector<1x1x80x3xbf16> to vector<80x3xbf16>
    %c0_12 = arith.constant 0 : index
    %c0_13 = arith.constant 0 : index
    %c11 = arith.constant 11 : index
    %c0_14 = arith.constant 0 : index
    %8 = vector.load %arg2[%c0_12, %c0_13, %c11, %c0_14] : memref<1x1x102x3xbf16, #tpu.memory_space<vmem>>, vector<1x1x80x3xbf16>
    %9 = vector.shape_cast %8 : vector<1x1x80x3xbf16> to vector<80x3xbf16>
    %c0_15 = arith.constant 0 : index
    %c0_16 = arith.constant 0 : index
    %c12 = arith.constant 12 : index
    %c0_17 = arith.constant 0 : index
    %10 = vector.load %arg2[%c0_15, %c0_16, %c12, %c0_17] : memref<1x1x102x3xbf16, #tpu.memory_space<vmem>>, vector<1x1x80x3xbf16>
    %11 = vector.shape_cast %10 : vector<1x1x80x3xbf16> to vector<80x3xbf16>
    %c0_18 = arith.constant 0 : index
    %c0_19 = arith.constant 0 : index
    %c20 = arith.constant 20 : index
    %c0_20 = arith.constant 0 : index
    %12 = vector.load %arg2[%c0_18, %c0_19, %c20, %c0_20] : memref<1x1x102x3xbf16, #tpu.memory_space<vmem>>, vector<1x1x80x3xbf16>
    %13 = vector.shape_cast %12 : vector<1x1x80x3xbf16> to vector<80x3xbf16>
    %c0_21 = arith.constant 0 : index
    %c0_22 = arith.constant 0 : index
    %c21 = arith.constant 21 : index
    %c0_23 = arith.constant 0 : index
    %14 = vector.load %arg2[%c0_21, %c0_22, %c21, %c0_23] : memref<1x1x102x3xbf16, #tpu.memory_space<vmem>>, vector<1x1x80x3xbf16>
    %15 = vector.shape_cast %14 : vector<1x1x80x3xbf16> to vector<80x3xbf16>
    %c0_24 = arith.constant 0 : index
    %c0_25 = arith.constant 0 : index
    %c22 = arith.constant 22 : index
    %c0_26 = arith.constant 0 : index
    %16 = vector.load %arg2[%c0_24, %c0_25, %c22, %c0_26] : memref<1x1x102x3xbf16, #tpu.memory_space<vmem>>, vector<1x1x80x3xbf16>
    %17 = vector.shape_cast %16 : vector<1x1x80x3xbf16> to vector<80x3xbf16>
    %18 = tpu.concatenate %1, %3, %5, %7, %9, %11, %13, %15, %17 in 1 : vector<80x3xbf16>, vector<80x3xbf16>, vector<80x3xbf16>, vector<80x3xbf16>, vector<80x3xbf16>, vector<80x3xbf16>, vector<80x3xbf16>, vector<80x3xbf16>, vector<80x3xbf16> -> vector<80x27xbf16>
    %c0_27 = arith.constant 0 : index
    %c0_28 = arith.constant 0 : index
    %19 = vector.load %arg3[%c0_27, %c0_28] : memref<27x16xbf16, #tpu.memory_space<vmem>>, vector<27x16xbf16>
    %cst = arith.constant dense<0.000000e+00> : vector<80x16xf32>
    %20 = tpu.matmul %18, %19, %cst {dimension_numbers = #tpu.dot_dimension_numbers<[1], [0], [0], [1], [0, 0, 1, 1], [], []>} : vector<80x27xbf16>, vector<27x16xbf16>, vector<80x16xf32> -> vector<80x16xf32>
    %c0_29 = arith.constant 0 : index
    %c0_30 = arith.constant 0 : index
    %21 = vector.load %arg4[%c0_29, %c0_30] : memref<1x16xf32, #tpu.memory_space<vmem>>, vector<1x16xf32>
    %22 = vector.broadcast %21 : vector<1x16xf32> to vector<80x16xf32>
    %23 = arith.addf %20, %22 : vector<80x16xf32>
    %24 = arith.truncf %23 : vector<80x16xf32> to vector<80x16xbf16>
    %c0_31 = arith.constant 0 : index
    %c0_32 = arith.constant 0 : index
    %c0_33 = arith.constant 0 : index
    %25 = vector.load %arg5[%c0_31, %c0_32, %c0_33] : memref<1x80x16xbf16, #tpu.memory_space<vmem>>, vector<1x80x16xbf16>
    %26 = vector.shape_cast %25 : vector<1x80x16xbf16> to vector<80x16xbf16>
    %27 = vector.shape_cast %24 : vector<80x16xbf16> to vector<1x80x16xbf16>
    tpu.vector_store %arg5[%c0_31, %c0_32, %c0_33], %27 {strides = array<i32>} : memref<1x80x16xbf16, #tpu.memory_space<vmem>>, vector<1x80x16xbf16>,
    return
  }
  func.func @transform_0(%arg0: i32, %arg1: i32) -> (i32, i32, i32, i32) {
    %c0_i32 = arith.constant 0 : i32
    %c0_i32_0 = arith.constant 0 : i32
    %c0_i32_1 = arith.constant 0 : i32
    return %arg0, %arg1, %c0_i32, %c0_i32_0 : i32, i32, i32, i32
  }
  func.func @transform_1(%arg0: i32, %arg1: i32) -> (i32, i32) {
    %c0_i32 = arith.constant 0 : i32
    %c0_i32_0 = arith.constant 0 : i32
    %c0_i32_1 = arith.constant 0 : i32
    return %c0_i32, %c0_i32_0 : i32, i32
  }
  func.func @transform_2(%arg0: i32, %arg1: i32) -> (i32, i32) {
    %c0_i32 = arith.constant 0 : i32
    %c0_i32_0 = arith.constant 0 : i32
    %c0_i32_1 = arith.constant 0 : i32
    return %c0_i32, %c0_i32_0 : i32, i32
  }
  func.func @transform_3(%arg0: i32, %arg1: i32) -> (i32, i32, i32) {
    %c0_i32 = arith.constant 0 : i32
    %c0_i32_0 = arith.constant 0 : i32
    return %arg0, %arg1, %c0_i32 : i32, i32, i32
  }
}

</mosaic_0001>

<llo_original>
// kernel: tpu_custom_call.1
$region0: #{tpu_custom_call.1}
  #allocation0 [shape = 'u32[]', space=smem, size = 0x4, offset = 0x4, fixed_abs, tag = 'smem constant byte address 0x4 - core index']
  #allocation1 [shape = 'u32[144,128]{1,0:T(1,128)}', space=vmem, size = 0x12000, scoped, tag = 'internal scratch']
  %s0 = inlined_call_operand.hbm [shape: bf16[2,1,102,3], index: 0, kind: input, shape index: {}]
  %s1 = inlined_call_operand.hbm [shape: bf16[27,16], index: 1, kind: input, shape index: {}]
  %s2 = inlined_call_operand.hbm [shape: f32[1,16], index: 2, kind: input, shape index: {}]
  %s3 = inlined_call_operand.hbm [shape: bf16[2,80,16], index: 3, kind: output, shape index: {}]
  %s4 = sld [smem:[#allocation0]]
  $region57: #{tpu_custom_call.1} parent=0
    _
  %s6 = ssub.s32 1, %s4
  %s7 = scalar_select 0, %s6, %s4
  $region1: #{tpu_custom_call.1} parent=0
    #allocation2 [shape = 'u8[53248]{0}', space=vmem, size = 0xd000, scoped, tag = 'input window, operand 0']
    #allocation3 [shape = 's32[2]{0}', space=sflag, size = 0x8, scoped, tag = 'scoped memory for tpu_custom_call.1']
    #allocation4 [shape = 's32[2]{0}', space=sflag, size = 0x8, scoped, tag = 'scoped memory for tpu_custom_call.1']
    #allocation5 [shape = 'u8[8192]{0}', space=vmem, size = 0x2000, scoped, tag = 'input window, operand 1, single buffered']
    #allocation6 [shape = 's32[1]{0}', space=sflag, size = 0x4, scoped, tag = 'scoped memory for tpu_custom_call.1']
    #allocation7 [shape = 'u8[512]{0}', space=vmem, size = 0x400, scoped, tag = 'input window, operand 2, single buffered']
    #allocation8 [shape = 'u8[40960]{0}', space=vmem, size = 0xa000, scoped, tag = 'output window, operand 0']
    %8 = vsyncpa [#allocation3], 0
    %s9 = scalar_lea.sflag [#allocation3], 1
    %10 = vsyncpa %s9, 0
    %11 = vsyncpa [#allocation6], 0
    %12 = vsyncpa [#allocation4], 0
    %s13 = scalar_lea.sflag [#allocation4], 1
    %14 = vsyncpa %s13, 0
    loop: start=0, step=1, limit=4
    $region2: #{tpu_custom_call.1} parent=1 // loop_pre_header
      _
    $region3: #{tpu_custom_call.1} parent=1 // loop_header
      %s16 = sphi 0, %s20
      %p17 = scmp.ge.s32.totalorder %s16, 4
      %s23 = sphi 0, %s35
      %s24 = sphi 0, %s31
      %s25 = sphi 0, %s23
      %s26 = sphi 0, %s24
      %s27 = sphi 0, %s25
      %s28 = sphi 0, %s26
      %s40 = sphi 0, %s42
      %s43 = sphi 0, %s40
      %s44 = sphi 0, %s43
      %s60 = sphi 0, %s44
      %s64 = sphi 0, %s64
      %s66 = sphi 0, %s64
      %s67 = sphi 0, %s66
      %s81 = sphi 0, %s67
      %s85 = sphi 0, %s85
      %s87 = sphi 0, %s85
      %s88 = sphi 0, %s87
      %s102 = sphi 0, %s88
      %s110 = sphi 0, %s112
      %s113 = sphi 0, %s110
      %s114 = sphi 0, %s113
      %s130 = sphi 0, %s114
    $region4: #{tpu_custom_call.1} parent=1 // loop_header_branch
      %19 = sbr.rel (%p17) target = $region8
    $region5: #{tpu_custom_call.1} parent=1 // loop_body
      %s21 = ssub.s32 %s16, 1
      %s22 = ssub.s32 %s16, 2
      %s29 = sadd.s32 1, %s24
      %p30 = scmp.ge.s32.totalorder %s29, 1
      %s31 = scalar_select %p30, 0, %s29
      %s32 = sadd.s32 1, %s23
      %s33 = scalar_select %p30, %s32, %s23
      %p34 = scmp.ge.s32.totalorder %s33, 2
      %s35 = scalar_select %p34, 0, %s33
      %s36 = ssub.s32 %s23, %s35
      %s37 = ssub.s32 %s24, %s31
      %s38 = sor.u32 %s36, %s37
      %p39 = scmp.eq.s32.totalorder %s38, 0
      %s41 = sadd.s32 %s40, 1
      %s42 = scalar_select %p39, %s40, %s41
      %p45 = pneg %p39
      %p46 = scmp.eq.s32.totalorder %s16, 1
      %p47 = por %p45, %p46
      %p48 = scmp.ne.s32.totalorder %s40, %s43
      %p49 = scmp.eq.s32.totalorder %s16, 0
      %p50 = por %p48, %p49
      %p51 = scmp.ne.s32.totalorder %s40, %s43
      %p52 = scmp.eq.s32.totalorder %s21, 1
      %p53 = por %p51, %p52
      %p54 = scmp.ne.s32.totalorder %s43, %s44
      %p55 = scmp.eq.s32.totalorder %s21, 0
      %p56 = por %p54, %p55
      %p57 = scmp.ne.s32.totalorder %s43, %s44
      %p58 = scmp.eq.s32.totalorder %s22, 1
      %p59 = por %p57, %p58
      %p61 = scmp.ne.s32.totalorder %s44, %s60
      %p62 = scmp.eq.s32.totalorder %s22, 0
      %p63 = por %p61, %p62
      %s65 = sadd.s32 %s64, 1
      %p68 = scmp.eq.s32.totalorder %s16, 1
      %p69 = scmp.ne.s32.totalorder %s64, %s66
      %p70 = scmp.eq.s32.totalorder %s16, 0
      %p71 = por %p69, %p70
      %p72 = scmp.ne.s32.totalorder %s64, %s66
      %p73 = scmp.eq.s32.totalorder %s21, 1
      %p74 = por %p72, %p73
      %p75 = scmp.ne.s32.totalorder %s66, %s67
      %p76 = scmp.eq.s32.totalorder %s21, 0
      %p77 = por %p75, %p76
      %p78 = scmp.ne.s32.totalorder %s66, %s67
      %p79 = scmp.eq.s32.totalorder %s22, 1
      %p80 = por %p78, %p79
      %p82 = scmp.ne.s32.totalorder %s67, %s81
      %p83 = scmp.eq.s32.totalorder %s22, 0
      %p84 = por %p82, %p83
      %s86 = sadd.s32 %s85, 1
      %p89 = scmp.eq.s32.totalorder %s16, 1
      %p90 = scmp.ne.s32.totalorder %s85, %s87
      %p91 = scmp.eq.s32.totalorder %s16, 0
      %p92 = por %p90, %p91
      %p93 = scmp.ne.s32.totalorder %s85, %s87
      %p94 = scmp.eq.s32.totalorder %s21, 1
      %p95 = por %p93, %p94
      %p96 = scmp.ne.s32.totalorder %s87, %s88
      %p97 = scmp.eq.s32.totalorder %s21, 0
      %p98 = por %p96, %p97
      %p99 = scmp.ne.s32.totalorder %s87, %s88
      %p100 = scmp.eq.s32.totalorder %s22, 1
      %p101 = por %p99, %p100
      %p103 = scmp.ne.s32.totalorder %s88, %s102
      %p104 = scmp.eq.s32.totalorder %s22, 0
      %p105 = por %p103, %p104
      %s106 = ssub.s32 %s23, %s35
      %s107 = ssub.s32 %s24, %s31
      %s108 = sor.u32 %s106, %s107
      %p109 = scmp.eq.s32.totalorder %s108, 0
      %s111 = sadd.s32 %s110, 1
      %s112 = scalar_select %p109, %s110, %s111
      %p115 = pneg %p109
      %p116 = scmp.eq.s32.totalorder %s16, 1
      %p117 = por %p115, %p116
      %p118 = scmp.ne.s32.totalorder %s110, %s113
      %p119 = scmp.eq.s32.totalorder %s16, 0
      %p120 = por %p118, %p119
      %p121 = scmp.ne.s32.totalorder %s110, %s113
      %p122 = scmp.eq.s32.totalorder %s21, 1
      %p123 = por %p121, %p122
      %p124 = scmp.ne.s32.totalorder %s113, %s114
      %p125 = scmp.eq.s32.totalorder %s21, 0
      %p126 = por %p124, %p125
      %p127 = scmp.ne.s32.totalorder %s113, %s114
      %p128 = scmp.eq.s32.totalorder %s22, 1
      %p129 = por %p127, %p128
      %p131 = scmp.ne.s32.totalorder %s114, %s130
      %p132 = scmp.eq.s32.totalorder %s22, 0
      %p133 = por %p131, %p132
      %p134 = scmp.le.s32.totalorder 1, %s16
      %p135 = scmp.lt.s32.totalorder %s16, 3
      %p136 = pnand %p134, %p135
      %p137 = pneg %p136
      // Predicated region
      $region9: #{tpu_custom_call.1} parent=5 // pred_check
        _
      $region10: #{tpu_custom_call.1} parent=5 // pred_check_branch
        %139 = sbr.rel (%p136) target = $region12
      $region11: #{tpu_custom_call.1} parent=5 // pred_region
        %s140 = ssub.s32 %s16, 1
        // Predicated region
        $region13: #{tpu_custom_call.1} parent=11 // pred_check
          %p141 = pneg %p77
        $region14: #{tpu_custom_call.1} parent=11 // pred_check_branch
          %143 = sbr.rel (%p141) target = $region16
        $region15: #{tpu_custom_call.1} parent=11 // pred_region
          %s145 = ssub.s32 256, 256
          %146 = vsyncadd [#allocation6], %s145
          %s147 = sshll.u32 [#allocation5], 4
          %s148 = int_to_ptr.vmem [resolvable:$true] %s147
          %153 = dma.hbm_to_vmem [thread:$0]  %s1, 256, %s148, [#allocation6], 64, 64, 4
        $region16: #{tpu_custom_call.1} parent=11 // pred_fallthru
          _
        // Predicated region
        $region17: #{tpu_custom_call.1} parent=11 // pred_check
          %p154 = pneg %p98
        $region18: #{tpu_custom_call.1} parent=11 // pred_check_branch
          %156 = sbr.rel (%p154) target = $region20
        $region19: #{tpu_custom_call.1} parent=11 // pred_region
          %s158 = ssub.s32 16, 16
          %159 = vsyncadd [#allocation6], %s158
          %s161 = sshll.u32 [#allocation7], 4
          %s162 = int_to_ptr.vmem [resolvable:$true] %s161
          %164 = dma.hbm_to_vmem [thread:$0]  %s2, 16, %s162, [#allocation6]
        $region20: #{tpu_custom_call.1} parent=11 // pred_fallthru
          _
      $region12: #{tpu_custom_call.1} parent=5 // pred_fallthru
        _
      %p165 = scmp.lt.s32.totalorder %s16, 2
      // Predicated region
      $region21: #{tpu_custom_call.1} parent=5 // pred_check
        %p166 = pneg %p165
      $region22: #{tpu_custom_call.1} parent=5 // pred_check_branch
        %168 = sbr.rel (%p166) target = $region24
      $region23: #{tpu_custom_call.1} parent=5 // pred_region
        // Predicated region
        $region25: #{tpu_custom_call.1} parent=23 // pred_check
          %p169 = pneg %p50
        $region26: #{tpu_custom_call.1} parent=23 // pred_check_branch
          %171 = sbr.rel (%p169) target = $region28
        $region27: #{tpu_custom_call.1} parent=23 // pred_region
          %s172 = sand.u32 %s40, 1
          %s173 = scalar_lea.sflag [#allocation3], %s172
          %s174 = sand.u32 %s40, 1
          %s175 = smul.addr %s174, 52
          %s176 = scalar_lea.vmem [#allocation2], %s175
          %s178 = ssub.s32 832, 832
          %179 = vsyncadd %s173, %s178
          %s180 = smul.addr %s24, 13
          %s181 = smul.addr %s23, 13
          %s182 = sadd.s32 %s180, %s181
          %s183 = smul.addr %s182, 64
          %s184 = scalar_lea.hbm %s0, %s183
          %s185 = sshll.u32 %s176, 4
          %s186 = int_to_ptr.vmem [resolvable:$true] %s185
          %191 = dma.hbm_to_vmem [thread:$0]  %s184, 832, %s186, %s173, 64, 64, 4
        $region28: #{tpu_custom_call.1} parent=23 // pred_fallthru
          _
      $region24: #{tpu_custom_call.1} parent=5 // pred_fallthru
        _
      %p192 = scmp.le.s32.totalorder 1, %s16
      %p193 = scmp.lt.s32.totalorder %s16, 3
      %p194 = pnand %p192, %p193
      %p195 = pneg %p194
      // Predicated region
      $region29: #{tpu_custom_call.1} parent=5 // pred_check
        _
      $region30: #{tpu_custom_call.1} parent=5 // pred_check_branch
        %197 = sbr.rel (%p194) target = $region32
      $region31: #{tpu_custom_call.1} parent=5 // pred_region
        %s198 = ssub.s32 %s16, 1
        %s199 = sand.u32 %s43, 1
        %s200 = scalar_lea.sflag [#allocation3], %s199
        %s201 = sand.u32 %s43, 1
        %s202 = smul.addr %s201, 52
        %s203 = scalar_lea.vmem [#allocation2], %s202
        // Predicated region
        $region33: #{tpu_custom_call.1} parent=31 // pred_check
          %p204 = pneg %p56
        $region34: #{tpu_custom_call.1} parent=31 // pred_check_branch
          %206 = sbr.rel (%p204) target = $region36
        $region35: #{tpu_custom_call.1} parent=31 // pred_region
          %207 = dma.done %s200, 832
        $region36: #{tpu_custom_call.1} parent=31 // pred_fallthru
          _
        // Predicated region
        $region37: #{tpu_custom_call.1} parent=31 // pred_check
          %p208 = pneg %p77
        $region38: #{tpu_custom_call.1} parent=31 // pred_check_branch
          %210 = sbr.rel (%p208) target = $region40
        $region39: #{tpu_custom_call.1} parent=31 // pred_region
          %211 = dma.done [#allocation6], 256
        $region40: #{tpu_custom_call.1} parent=31 // pred_fallthru
          _
        // Predicated region
        $region41: #{tpu_custom_call.1} parent=31 // pred_check
          %p212 = pneg %p98
        $region42: #{tpu_custom_call.1} parent=31 // pred_check_branch
          %214 = sbr.rel (%p212) target = $region44
        $region43: #{tpu_custom_call.1} parent=31 // pred_region
          %215 = dma.done [#allocation6], 16
        $region44: #{tpu_custom_call.1} parent=31 // pred_fallthru
          _
        %s216 = sand.u32 %s43, 1
        %s217 = scalar_lea.sflag [#allocation3], %s216
        %s218 = sand.u32 %s43, 1
        %s219 = smul.addr %s218, 52
        %s220 = scalar_lea.vmem [#allocation2], %s219
        %p221 = pneg %p56
        %p222 = pneg %p53
        %p223 = pneg %p77
        %p224 = pneg %p74
        %p225 = pneg %p98
        %p226 = pneg %p95
        %p227 = pneg %p126
        %p228 = pneg %p123
        %s229 = sand.u32 %s113, 1
        %s230 = scalar_lea.sflag [#allocation4], %s229
        %s231 = sand.u32 %s113, 1
        %s232 = smul.addr %s231, 40
        %s233 = scalar_lea.vmem [#allocation8], %s232
        %s234 = smul.u32 10, %s26
        %v236 = vld [vmem:[%s203] sm:$0xf]
        %v237 = vld [vmem:[%s203 + $0x4] sm:$0xf]
        %v238 = vld [vmem:[%s203 + $0x8] sm:$0xf]
        %v239 = vld [vmem:[%s203 + $0xc] sm:$0xf]
        %v240 = vld [vmem:[%s203 + $0x10] sm:$0xf]
        %v241 = vld [vmem:[%s203 + $0x14] sm:$0xf]
        %v242 = vld [vmem:[%s203 + $0x18] sm:$0xf]
        %v243 = vld [vmem:[%s203 + $0x1c] sm:$0xf]
        %v244 = vld [vmem:[%s203 + $0x20] sm:$0xf]
        %v245 = vld [vmem:[%s203 + $0x24] sm:$0xf]
        %v246 = vld [vmem:[%s203 + $0x28] sm:$0x1]
        %v247 = vld [vmem:[%s203] sm:$0xe]
        %v248 = vld [vmem:[%s203 + $0x4] sm:$0xe]
        %v249 = vld [vmem:[%s203 + $0x28] sm:$0xf]
        %v250 = vld [vmem:[%s203 + $0x2c] sm:$0x1]
        %v251 = vld [vmem:[%s203 + $0x2c] sm:$0x3]
        %v252 = vld [vmem:[%s203 + $0x4] sm:$0xc]
        %v253 = vld [vmem:[%s203 + $0x8] sm:$0xc]
        %v254 = vld [vmem:[%s203 + $0x2c] sm:$0xf]
        %v255 = vld [vmem:[%s203 + $0x30] sm:$0x3]
        %v256 = vld [vmem:[%s203 + $0x30] sm:$0x7]
        %v257 = vld [vmem:[%s203 + $0x8] sm:$0x8]
        %v268 = vunpack.c.l.b16 %v236
        %v269 = vunpack.c.l.b16 %v237
        %v270 = vunpack.c.l.b16 %v238
        %v271 = vunpack.c.l.b16 %v239
        %v272 = vunpack.c.l.b16 %v240
        %v273 = vunpack.c.l.b16 %v241
        %v274 = vunpack.c.l.b16 %v242
        %v275 = vunpack.c.l.b16 %v243
        %v276 = vunpack.c.l.b16 %v244
        %v277 = vunpack.c.l.b16 %v245
        %v278 = vpack.c.b16 %v269, %v268
        %v279 = vpack.c.b16 %v271, %v270
        %v280 = vpack.c.b16 %v273, %v272
        %v281 = vpack.c.b16 %v275, %v274
        %v282 = vpack.c.b16 %v277, %v276
        %v284 = vunpack.c.l.b16 %v246
        %v285 = vpack.c.b16 %v284, %v284
        %vm286 = vsmask.f32 7424
        %v288 = vshrl.u32 %v278, 16
        %v290 = vshll.u32 %v278, 16
        %v292 = vrot.slane %v290, 1
        %v293 = vor.u32 %v288, %v292
        %v295 = vshll.u32 %v279, 16
        %v297 = vrot.slane %v295, 1
        %v298 = vsel %vm286, %v293, %v297
        %v299 = vshrl.u32 %v279, 16
        %v301 = vor.u32 %v299, %v297
        %v303 = vshll.u32 %v280, 16
        %v305 = vrot.slane %v303, 1
        %v306 = vsel %vm286, %v301, %v305
        %v307 = vshrl.u32 %v280, 16
        %v309 = vor.u32 %v307, %v305
        %v311 = vshll.u32 %v281, 16
        %v313 = vrot.slane %v311, 1
        %v314 = vsel %vm286, %v309, %v313
        %v315 = vshrl.u32 %v281, 16
        %v317 = vor.u32 %v315, %v313
        %v319 = vshll.u32 %v282, 16
        %v321 = vrot.slane %v319, 1
        %v322 = vsel %vm286, %v317, %v321
        %v323 = vshrl.u32 %v282, 16
        %v325 = vor.u32 %v323, %v321
        %v327 = vshll.u32 %v285, 16
        %v329 = vrot.slane %v327, 1
        %v330 = vsel %vm286, %v325, %v329
        %331 = vrot.lane.b32.xlu0 %v298, 3
        %v332 = vpop.permute.xlu0 %331
        %333 = vrot.lane.b32.xlu0 %v306, 3
        %v334 = vpop.permute.xlu0 %333
        %335 = vrot.lane.b32.xlu0 %v314, 3
        %v336 = vpop.permute.xlu0 %335
        %337 = vrot.lane.b32.xlu0 %v322, 3
        %v338 = vpop.permute.xlu0 %337
        %339 = vrot.lane.b32.xlu0 %v330, 3
        %v340 = vpop.permute.xlu0 %339
        %v342 = vunpack.c.l.b16 %v247
        %v343 = vpack.c.b16 %v269, %v342
        %vm344 = vcmask 1046528
        %v345 = vrot.slane %v343, 1
        %v346 = vrot.slane %v279, 1
        %v347 = vsel %vm344, %v345, %v346
        %v348 = vrot.slane %v280, 1
        %v349 = vsel %vm344, %v346, %v348
        %v350 = vrot.slane %v281, 1
        %v351 = vsel %vm344, %v348, %v350
        %v352 = vrot.slane %v282, 1
        %v353 = vsel %vm344, %v350, %v352
        %v354 = vrot.slane %v285, 1
        %v355 = vsel %vm344, %v352, %v354
        %356 = vrot.lane.b32.xlu0 %v347, 6
        %v357 = vpop.permute.xlu0 %356
        %358 = vrot.lane.b32.xlu0 %v349, 6
        %v359 = vpop.permute.xlu0 %358
        %360 = vrot.lane.b32.xlu0 %v351, 6
        %v361 = vpop.permute.xlu0 %360
        %362 = vrot.lane.b32.xlu0 %v353, 6
        %v363 = vpop.permute.xlu0 %362
        %364 = vrot.lane.b32.xlu0 %v355, 6
        %v365 = vpop.permute.xlu0 %364
        %v369 = vunpack.c.l.b16 %v248
        %v370 = vunpack.c.l.b16 %v249
        %v371 = vunpack.c.l.b16 %v250
        %v372 = vpack.c.b16 %v270, %v369
        %v373 = vpack.c.b16 %v272, %v271
        %v374 = vpack.c.b16 %v274, %v273
        %v375 = vpack.c.b16 %v276, %v275
        %v376 = vpack.c.b16 %v370, %v277
        %v377 = vpack.c.b16 %v371, %v371
        %v378 = vrot.slane %v372, 1
        %v379 = vrot.slane %v373, 1
        %v380 = vsel %vm344, %v378, %v379
        %v381 = vrot.slane %v374, 1
        %v382 = vsel %vm344, %v379, %v381
        %v383 = vrot.slane %v375, 1
        %v384 = vsel %vm344, %v381, %v383
        %v385 = vrot.slane %v376, 1
        %v386 = vsel %vm344, %v383, %v385
        %v387 = vrot.slane %v377, 1
        %v388 = vsel %vm344, %v385, %v387
        %389 = vrot.lane.b32.xlu0 %v380, 9
        %v390 = vpop.permute.xlu0 %389
        %391 = vrot.lane.b32.xlu0 %v382, 9
        %v392 = vpop.permute.xlu0 %391
        %393 = vrot.lane.b32.xlu0 %v384, 9
        %v394 = vpop.permute.xlu0 %393
        %395 = vrot.lane.b32.xlu0 %v386, 9
        %v396 = vpop.permute.xlu0 %395
        %397 = vrot.lane.b32.xlu0 %v388, 9
        %v398 = vpop.permute.xlu0 %397
        %v400 = vunpack.c.l.b16 %v251
        %v401 = vpack.c.b16 %v400, %v400
        %vm402 = vsmask.f32 6400
        %v404 = vshrl.u32 %v372, 16
        %v406 = vrot.slane %v404, 1
        %v407 = vshll.u32 %v372, 16
        %v409 = vrot.slane %v407, 2
        %v410 = vor.u32 %v406, %v409
        %v412 = vshrl.u32 %v373, 16
        %v414 = vrot.slane %v412, 1
        %v415 = vshll.u32 %v373, 16
        %v417 = vrot.slane %v415, 2
        %v418 = vor.u32 %v414, %v417
        %v419 = vsel %vm402, %v410, %v418
        %v421 = vshrl.u32 %v374, 16
        %v423 = vrot.slane %v421, 1
        %v424 = vshll.u32 %v374, 16
        %v426 = vrot.slane %v424, 2
        %v427 = vor.u32 %v423, %v426
        %v428 = vsel %vm402, %v418, %v427
        %v430 = vshrl.u32 %v375, 16
        %v432 = vrot.slane %v430, 1
        %v433 = vshll.u32 %v375, 16
        %v435 = vrot.slane %v433, 2
        %v436 = vor.u32 %v432, %v435
        %v437 = vsel %vm402, %v427, %v436
        %v439 = vshrl.u32 %v376, 16
        %v441 = vrot.slane %v439, 1
        %v442 = vshll.u32 %v376, 16
        %v444 = vrot.slane %v442, 2
        %v445 = vor.u32 %v441, %v444
        %v446 = vsel %vm402, %v436, %v445
        %v448 = vshrl.u32 %v401, 16
        %v450 = vrot.slane %v448, 1
        %v451 = vshll.u32 %v401, 16
        %v453 = vrot.slane %v451, 2
        %v454 = vor.u32 %v450, %v453
        %v455 = vsel %vm402, %v445, %v454
        %456 = vrot.lane.b32.xlu0 %v419, 12
        %v457 = vpop.permute.xlu0 %456
        %458 = vrot.lane.b32.xlu0 %v428, 12
        %v459 = vpop.permute.xlu0 %458
        %460 = vrot.lane.b32.xlu0 %v437, 12
        %v461 = vpop.permute.xlu0 %460
        %462 = vrot.lane.b32.xlu0 %v446, 12
        %v463 = vpop.permute.xlu0 %462
        %464 = vrot.lane.b32.xlu0 %v455, 12
        %v465 = vpop.permute.xlu0 %464
        %v467 = vunpack.c.l.b16 %v252
        %v468 = vpack.c.b16 %v270, %v467
        %vm469 = vcmask 1045504
        %v470 = vrot.slane %v468, 2
        %v471 = vrot.slane %v373, 2
        %v472 = vsel %vm469, %v470, %v471
        %v473 = vrot.slane %v374, 2
        %v474 = vsel %vm469, %v471, %v473
        %v475 = vrot.slane %v375, 2
        %v476 = vsel %vm469, %v473, %v475
        %v477 = vrot.slane %v376, 2
        %v478 = vsel %vm469, %v475, %v477
        %v479 = vrot.slane %v401, 2
        %v480 = vsel %vm469, %v477, %v479
        %481 = vrot.lane.b32.xlu0 %v472, 15
        %v482 = vpop.permute.xlu0 %481
        %483 = vrot.lane.b32.xlu0 %v474, 15
        %v484 = vpop.permute.xlu0 %483
        %485 = vrot.lane.b32.xlu0 %v476, 15
        %v486 = vpop.permute.xlu0 %485
        %487 = vrot.lane.b32.xlu0 %v478, 15
        %v488 = vpop.permute.xlu0 %487
        %489 = vrot.lane.b32.xlu0 %v480, 15
        %v490 = vpop.permute.xlu0 %489
        %v494 = vunpack.c.l.b16 %v253
        %v495 = vunpack.c.l.b16 %v254
        %v496 = vunpack.c.l.b16 %v255
        %v497 = vpack.c.b16 %v271, %v494
        %v498 = vpack.c.b16 %v495, %v370
        %v499 = vpack.c.b16 %v496, %v496
        %v500 = vrot.slane %v497, 2
        %v501 = vrot.slane %v280, 2
        %v502 = vsel %vm469, %v500, %v501
        %v503 = vrot.slane %v281, 2
        %v504 = vsel %vm469, %v501, %v503
        %v505 = vrot.slane %v282, 2
        %v506 = vsel %vm469, %v503, %v505
        %v507 = vrot.slane %v498, 2
        %v508 = vsel %vm469, %v505, %v507
        %v509 = vrot.slane %v499, 2
        %v510 = vsel %vm469, %v507, %v509
        %511 = vrot.lane.b32.xlu0 %v502, 18
        %v512 = vpop.permute.xlu0 %511
        %513 = vrot.lane.b32.xlu0 %v504, 18
        %v514 = vpop.permute.xlu0 %513
        %515 = vrot.lane.b32.xlu0 %v506, 18
        %v516 = vpop.permute.xlu0 %515
        %517 = vrot.lane.b32.xlu0 %v508, 18
        %v518 = vpop.permute.xlu0 %517
        %519 = vrot.lane.b32.xlu0 %v510, 18
        %v520 = vpop.permute.xlu0 %519
        %v522 = vunpack.c.l.b16 %v256
        %v523 = vpack.c.b16 %v522, %v522
        %vm524 = vsmask.f32 5376
        %v526 = vshrl.u32 %v497, 16
        %v528 = vrot.slane %v526, 2
        %v529 = vshll.u32 %v497, 16
        %v531 = vrot.slane %v529, 3
        %v532 = vor.u32 %v528, %v531
        %v533 = vrot.slane %v307, 2
        %v534 = vrot.slane %v303, 3
        %v535 = vor.u32 %v533, %v534
        %v536 = vsel %vm524, %v532, %v535
        %v537 = vrot.slane %v315, 2
        %v538 = vrot.slane %v311, 3
        %v539 = vor.u32 %v537, %v538
        %v540 = vsel %vm524, %v535, %v539
        %v541 = vrot.slane %v323, 2
        %v542 = vrot.slane %v319, 3
        %v543 = vor.u32 %v541, %v542
        %v544 = vsel %vm524, %v539, %v543
        %v546 = vshrl.u32 %v498, 16
        %v548 = vrot.slane %v546, 2
        %v549 = vshll.u32 %v498, 16
        %v551 = vrot.slane %v549, 3
        %v552 = vor.u32 %v548, %v551
        %v553 = vsel %vm524, %v543, %v552
        %v555 = vshrl.u32 %v523, 16
        %v557 = vrot.slane %v555, 2
        %v558 = vshll.u32 %v523, 16
        %v560 = vrot.slane %v558, 3
        %v561 = vor.u32 %v557, %v560
        %v562 = vsel %vm524, %v552, %v561
        %563 = vrot.lane.b32.xlu0 %v536, 21
        %v564 = vpop.permute.xlu0 %563
        %565 = vrot.lane.b32.xlu0 %v540, 21
        %v566 = vpop.permute.xlu0 %565
        %567 = vrot.lane.b32.xlu0 %v544, 21
        %v568 = vpop.permute.xlu0 %567
        %569 = vrot.lane.b32.xlu0 %v553, 21
        %v570 = vpop.permute.xlu0 %569
        %571 = vrot.lane.b32.xlu0 %v562, 21
        %v572 = vpop.permute.xlu0 %571
        %v574 = vunpack.c.l.b16 %v257
        %v575 = vpack.c.b16 %v271, %v574
        %vm576 = vcmask 1044480
        %v577 = vrot.slane %v575, 3
        %v578 = vrot.slane %v280, 3
        %v579 = vsel %vm576, %v577, %v578
        %v580 = vrot.slane %v281, 3
        %v581 = vsel %vm576, %v578, %v580
        %v582 = vrot.slane %v282, 3
        %v583 = vsel %vm576, %v580, %v582
        %v584 = vrot.slane %v498, 3
        %v585 = vsel %vm576, %v582, %v584
        %v586 = vrot.slane %v523, 3
        %v587 = vsel %vm576, %v584, %v586
        %588 = vrot.lane.b32.xlu0 %v579, 24
        %v589 = vpop.permute.xlu0 %588
        %590 = vrot.lane.b32.xlu0 %v581, 24
        %v591 = vpop.permute.xlu0 %590
        %592 = vrot.lane.b32.xlu0 %v583, 24
        %v593 = vpop.permute.xlu0 %592
        %594 = vrot.lane.b32.xlu0 %v585, 24
        %v595 = vpop.permute.xlu0 %594
        %596 = vrot.lane.b32.xlu0 %v587, 24
        %v597 = vpop.permute.xlu0 %596
        %vm598 = vcmask 23552
        %v600 = vsel %vm598, %v278, %v332
        %v602 = vsel %vm598, %v279, %v334
        %v604 = vsel %vm598, %v280, %v336
        %v606 = vsel %vm598, %v281, %v338
        %v608 = vsel %vm598, %v282, %v340
        %vm609 = vcmask 48128
        %v611 = vsel %vm609, %v600, %v357
        %v613 = vsel %vm609, %v602, %v359
        %v615 = vsel %vm609, %v604, %v361
        %v617 = vsel %vm609, %v606, %v363
        %v619 = vsel %vm609, %v608, %v365
        %vm620 = vcmask 72704
        %v622 = vsel %vm620, %v611, %v390
        %v624 = vsel %vm620, %v613, %v392
        %v626 = vsel %vm620, %v615, %v394
        %v628 = vsel %vm620, %v617, %v396
        %v630 = vsel %vm620, %v619, %v398
        %vm631 = vcmask 97280
        %v633 = vsel %vm631, %v622, %v457
        %v635 = vsel %vm631, %v624, %v459
        %v637 = vsel %vm631, %v626, %v461
        %v639 = vsel %vm631, %v628, %v463
        %v641 = vsel %vm631, %v630, %v465
        %vm642 = vcmask 121856
        %v644 = vsel %vm642, %v633, %v482
        %v646 = vsel %vm642, %v635, %v484
        %v648 = vsel %vm642, %v637, %v486
        %v650 = vsel %vm642, %v639, %v488
        %v652 = vsel %vm642, %v641, %v490
        %vm653 = vcmask 146432
        %v655 = vsel %vm653, %v644, %v512
        %v657 = vsel %vm653, %v646, %v514
        %v659 = vsel %vm653, %v648, %v516
        %v661 = vsel %vm653, %v650, %v518
        %v663 = vsel %vm653, %v652, %v520
        %vm664 = vcmask 171008
        %v666 = vsel %vm664, %v655, %v564
        %v668 = vsel %vm664, %v657, %v566
        %v670 = vsel %vm664, %v659, %v568
        %v672 = vsel %vm664, %v661, %v570
        %v674 = vsel %vm664, %v663, %v572
        %vm675 = vcmask 195584
        %v677 = vsel %vm675, %v666, %v589
        %v679 = vsel %vm675, %v668, %v591
        %v681 = vsel %vm675, %v670, %v593
        %v683 = vsel %vm675, %v672, %v595
        %v685 = vsel %vm675, %v674, %v597
        %v686 = vld [vmem:[#allocation5] sm:$0xf]
        %v687 = vld [vmem:[#allocation5 + $0x4] sm:$0xf]
        %v688 = vld [vmem:[#allocation5 + $0x8] sm:$0xf]
        %v689 = vld [vmem:[#allocation5 + $0xc] sm:$0x3]
        %v690 = vld [vmem:[#allocation7] sm:$0x1]
        %v692 = vlaneseq
        %v693 = vshrl.u32 %v692, 7
        %v694 = vsub.s32 0, %v693
        %v695 = vrot.slane %v690, %v694
        %v701 = vunpack.c.l.b16 %v686
        %v702 = vunpack.c.l.b16 %v687
        %v703 = vunpack.c.l.b16 %v688
        %v704 = vunpack.c.l.b16 %v689
        %v705 = vpack.c.b16 %v702, %v701
        %v706 = vpack.c.b16 %v704, %v703
        %vm708 = vcmask 220160
        %v709 = vsel %vm708, %v677, 0
        %v711 = vsel %vm708, %v679, 0
        %v713 = vsel %vm708, %v681, 0
        %v715 = vsel %vm708, %v683, 0
        %v717 = vsel %vm708, %v685, 0
        %vm719 = vcmask 1044480
        %vm720 = vcmask 1045504
        %v721 = vsel %vm719, 4294967295, 65535
        %v722 = vsel %vm720, %v721, 0
        %v724 = vand.u32 %v706, %v722
        %726 = vmatprep.subr.bf16.mxu0 0
        %727 = vmatpush1.bf16.msra.mxu0 %v705
        %728 = vmatprep.subr.bf16.mxu0 0
        %729 = vmatpush1.bf16.msra.mxu0 %v724
        %730 = vmatprep.subr.bf16.mxu0 0
        %731 = vmatpush1.bf16.msra.mxu0 0
        %732 = vmatprep.subr.bf16.mxu0 0
        %733 = vmatpush1.bf16.msra.mxu0 0
        %734 = vmatprep.subr.bf16.mxu0 0
        %735 = vmatpush1.bf16.msra.mxu0 0
        %736 = vmatprep.subr.bf16.mxu0 0
        %737 = vmatpush1.bf16.msra.mxu0 0
        %738 = vmatprep.subr.bf16.mxu0 0
        %739 = vmatpush1.bf16.msra.mxu0 0
        %740 = vmatprep.subr.bf16.mxu0 0
        %741 = vmatpush1.bf16.msra.mxu0 0
        %742 = vmatprep.subr.bf16.mxu0 0
        %743 = vmatpush1.bf16.msra.mxu0 0
        %744 = vmatprep.subr.bf16.mxu0 0
        %745 = vmatpush1.bf16.msra.mxu0 0
        %746 = vmatprep.subr.bf16.mxu0 0
        %747 = vmatpush1.bf16.msra.mxu0 0
        %748 = vmatprep.subr.bf16.mxu0 0
        %749 = vmatpush1.bf16.msra.mxu0 0
        %750 = vmatprep.subr.bf16.mxu0 0
        %751 = vmatpush1.bf16.msra.mxu0 0
        %752 = vmatprep.subr.bf16.mxu0 0
        %753 = vmatpush1.bf16.msra.mxu0 0
        %754 = vmatprep.subr.bf16.mxu0 0
        %755 = vmatpush1.bf16.msra.mxu0 0
        %756 = vmatprep.subr.bf16.mxu0 0
        %757 = vmatpush1.bf16.msra.mxu0 0
        %758 = vmatprep.mubr.bf16.mxu0 0
        %759 = vmatmul.mubr.bf16.gmra.mrb[0].mxu0 %v709
        %v760 = vpop.f32.mrb[0].mxu0
        %v761 = vadd.f32 %v695, %v760
        %v762 = vpop.f32.mrb[0].mxu0
        %v763 = vpop.f32.mrb[0].mxu0
        %v764 = vadd.f32 %v695, %v763
        %v765 = vpop.f32.mrb[0].mxu0
        %766 = vmatprep.mubr.bf16.mxu0 0
        %767 = vmatmul.mubr.bf16.gmra.mrb[0].mxu0 %v711
        %v768 = vpop.f32.mrb[0].mxu0
        %v769 = vadd.f32 %v695, %v768
        %v770 = vpop.f32.mrb[0].mxu0
        %v771 = vpop.f32.mrb[0].mxu0
        %v772 = vadd.f32 %v695, %v771
        %v773 = vpop.f32.mrb[0].mxu0
        %774 = vmatprep.mubr.bf16.mxu0 0
        %775 = vmatmul.mubr.bf16.gmra.mrb[0].mxu0 %v713
        %v776 = vpop.f32.mrb[0].mxu0
        %v777 = vadd.f32 %v695, %v776
        %v778 = vpop.f32.mrb[0].mxu0
        %v779 = vpop.f32.mrb[0].mxu0
        %v780 = vadd.f32 %v695, %v779
        %v781 = vpop.f32.mrb[0].mxu0
        %782 = vmatprep.mubr.bf16.mxu0 0
        %783 = vmatmul.mubr.bf16.gmra.mrb[0].mxu0 %v715
        %v784 = vpop.f32.mrb[0].mxu0
        %v785 = vadd.f32 %v695, %v784
        %v786 = vpop.f32.mrb[0].mxu0
        %v787 = vpop.f32.mrb[0].mxu0
        %v788 = vadd.f32 %v695, %v787
        %v789 = vpop.f32.mrb[0].mxu0
        %790 = vmatprep.mubr.bf16.mxu0 0
        %791 = vmatmul.mubr.bf16.gmra.mrb[0].mxu0 %v717
        %v792 = vpop.f32.mrb[0].mxu0
        %v793 = vadd.f32 %v695, %v792
        %v794 = vpop.f32.mrb[0].mxu0
        %v795 = vpop.f32.mrb[0].mxu0
        %v796 = vadd.f32 %v695, %v795
        %v797 = vpop.f32.mrb[0].mxu0
        %798 = vdwg.mxu0
        %v799 = vpack.c.bf16 %v764, %v761
        %v800 = vpack.c.bf16 %v772, %v769
        %v801 = vpack.c.bf16 %v780, %v777
        %v802 = vpack.c.bf16 %v788, %v785
        %v803 = vpack.c.bf16 %v796, %v793
        %v809 = vunpack.c.l.b16 %v799
        %v810 = vunpack.c.h.b16 %v799
        %v811 = vunpack.c.l.b16 %v800
        %v812 = vunpack.c.h.b16 %v800
        %v813 = vunpack.c.l.b16 %v801
        %v814 = vunpack.c.h.b16 %v801
        %v815 = vunpack.c.l.b16 %v802
        %v816 = vunpack.c.h.b16 %v802
        %v817 = vunpack.c.l.b16 %v803
        %v818 = vunpack.c.h.b16 %v803
        %v819 = vpack.c.b16 %v809, %v809
        %v820 = vpack.c.b16 %v810, %v810
        %v821 = vpack.c.b16 %v811, %v811
        %v822 = vpack.c.b16 %v812, %v812
        %v823 = vpack.c.b16 %v813, %v813
        %v824 = vpack.c.b16 %v814, %v814
        %v825 = vpack.c.b16 %v815, %v815
        %v826 = vpack.c.b16 %v816, %v816
        %v827 = vpack.c.b16 %v817, %v817
        %v828 = vpack.c.b16 %v818, %v818
        %vm839 = vcmask 125952
        %840 = vst.msk [vmem:[%s233] sm:$0xf] %vm839, %v819
        %841 = vst.msk [vmem:[%s233 + $0x4] sm:$0xf] %vm839, %v820
        %842 = vst.msk [vmem:[%s233 + $0x8] sm:$0xf] %vm839, %v821
        %843 = vst.msk [vmem:[%s233 + $0xc] sm:$0xf] %vm839, %v822
        %844 = vst.msk [vmem:[%s233 + $0x10] sm:$0xf] %vm839, %v823
        %845 = vst.msk [vmem:[%s233 + $0x14] sm:$0xf] %vm839, %v824
        %846 = vst.msk [vmem:[%s233 + $0x18] sm:$0xf] %vm839, %v825
        %847 = vst.msk [vmem:[%s233 + $0x1c] sm:$0xf] %vm839, %v826
        %848 = vst.msk [vmem:[%s233 + $0x20] sm:$0xf] %vm839, %v827
        %849 = vst.msk [vmem:[%s233 + $0x24] sm:$0xf] %vm839, %v828
        %s850 = sand.u32 %s113, 1
        %s851 = scalar_lea.sflag [#allocation4], %s850
        %s852 = sand.u32 %s113, 1
        %s853 = smul.addr %s852, 40
        %s854 = scalar_lea.vmem [#allocation8], %s853
        // Predicated region
        $region45: #{tpu_custom_call.1} parent=31 // pred_check
          %p855 = pneg %p123
        $region46: #{tpu_custom_call.1} parent=31 // pred_check_branch
          %857 = sbr.rel (%p855) target = $region48
        $region47: #{tpu_custom_call.1} parent=31 // pred_region
          %s858 = smul.u32 10, %s26
          %s860 = ssub.s32 640, 640
          %861 = vsyncadd %s851, %s860
          %s862 = smul.addr %s25, 10
          %s863 = sadd.s32 %s858, %s862
          %s864 = smul.addr %s863, 64
          %s865 = scalar_lea.hbm %s3, %s864
          %s866 = sshll.u32 %s854, 4
          %s867 = int_to_ptr.vmem [resolvable:$true] %s866
          %872 = dma.vmem_to_hbm [thread:$0]  %s867, 640, %s865, %s851, 64, 64, 4
        $region48: #{tpu_custom_call.1} parent=31 // pred_fallthru
          _
      $region32: #{tpu_custom_call.1} parent=5 // pred_fallthru
        _
      %p873 = scmp.le.s32.totalorder 2, %s16
      // Predicated region
      $region49: #{tpu_custom_call.1} parent=5 // pred_check
        %p874 = pneg %p873
      $region50: #{tpu_custom_call.1} parent=5 // pred_check_branch
        %876 = sbr.rel (%p874) target = $region52
      $region51: #{tpu_custom_call.1} parent=5 // pred_region
        %s877 = ssub.s32 %s16, 2
        // Predicated region
        $region53: #{tpu_custom_call.1} parent=51 // pred_check
          %p878 = pneg %p129
        $region54: #{tpu_custom_call.1} parent=51 // pred_check_branch
          %880 = sbr.rel (%p878) target = $region56
        $region55: #{tpu_custom_call.1} parent=51 // pred_region
          %s881 = sand.u32 %s114, 1
          %s882 = scalar_lea.sflag [#allocation4], %s881
          %s883 = sand.u32 %s114, 1
          %s884 = smul.addr %s883, 40
          %s885 = scalar_lea.vmem [#allocation8], %s884
          %886 = dma.done %s882, 640
        $region56: #{tpu_custom_call.1} parent=51 // pred_fallthru
          _
      $region52: #{tpu_custom_call.1} parent=5 // pred_fallthru
        _
    $region6: #{tpu_custom_call.1} parent=1 // loop_footer
      %s20 = sadd.s32 1, %s16
    $region7: #{tpu_custom_call.1} parent=1 // loop_footer_branch
      %15 = sbr.rel target = $region3
    $region8: #{tpu_custom_call.1} parent=1 // loop_exit
      _
    %887 = vsyncpa [#allocation3], 1
    %s888 = scalar_lea.sflag [#allocation3], 1
    %889 = vsyncpa %s888, 1
    %890 = vsyncpa [#allocation6], 1
    %891 = vsyncpa [#allocation4], 1
    %s892 = scalar_lea.sflag [#allocation4], 1
    %893 = vsyncpa %s892, 1

</llo_original>
